<compile_context>
chip_gen: v7x
topology: tpu7x:2x2x1
jax: 0.10.0
libtpu: 0.0.40
codegen_flags: <defaults>
</compile_context>

<pallas_src>
import jax
import jax.numpy as jnp
from jax.experimental import pallas as pl
from jax.experimental.pallas import tpu as pltpu


OUT_PAD = 8      # padded output width (true out_dim=2 sliced in the wrapper)
TB_MAX = 1024    # max batch tile (f32 x tile = 2 MiB; x2 buffers fits all gens)


def _round_up(n, m):
    return ((n + m - 1) // m) * m


def clip_head_kernel(x_ref, w1_ref, b1_ref, w2_ref, b2_ref, o_ref):
    # In-kernel cast to bf16 (operands), f32 MXU accumulation.
    x = x_ref[...].astype(jnp.bfloat16)
    h = jnp.dot(x, w1_ref[...], preferred_element_type=jnp.float32)
    # Bias + ReLU in f32 on the VPU.
    h = jnp.maximum(h + b1_ref[...], 0.0)
    # Second linear into the (narrow) padded output.
    out = jnp.dot(h.astype(jnp.bfloat16), w2_ref[...],
                  preferred_element_type=jnp.float32)
    o_ref[...] = (out + b2_ref[...]).astype(o_ref.dtype)


def clip_head(x, w1, b1, w2, b2):
    """x: [B, D]; w1: [D, H]; b1: [1, H]; w2: [H, out_dim]; b2: [1, out_dim]."""
    B, D = x.shape
    H = w1.shape[1]
    out_dim = w2.shape[1]

    # Batch tile: aim for >= 2 grid steps (v7x megacore), sublane-aligned,
    # capped at TB_MAX so VMEM footprint stays small on v5e.
    tb = min(TB_MAX, _round_up(max(pl.cdiv(B, 2), 1), 8))
    tb = max(tb, 8)
    grid = (pl.cdiv(B, tb),)   # ragged boundary block handled by Pallas masking

    # Weights to bf16 (MXU operands); biases stay f32 (elementwise path in f32).
    w1_in = w1.astype(jnp.bfloat16)
    b1_in = b1.astype(jnp.float32).reshape(1, H)
    w2_in = jnp.pad(w2.astype(jnp.bfloat16), ((0, 0), (0, OUT_PAD - out_dim)))
    b2_in = jnp.pad(b2.astype(jnp.float32).reshape(1, out_dim),
                    ((0, 0), (0, OUT_PAD - out_dim)))

    out_padded = pl.pallas_call(
        clip_head_kernel,
        out_shape=jax.ShapeDtypeStruct((B, OUT_PAD), x.dtype),
        grid=grid,
        in_specs=[
            pl.BlockSpec((tb, D), lambda i: (i, 0)),        # x tile (streamed, f32)
            pl.BlockSpec((D, H), lambda i: (0, 0)),         # w1 (VMEM-resident)
            pl.BlockSpec((1, H), lambda i: (0, 0)),         # b1 (resident)
            pl.BlockSpec((H, OUT_PAD), lambda i: (0, 0)),   # w2 padded (resident)
            pl.BlockSpec((1, OUT_PAD), lambda i: (0, 0)),   # b2 padded (resident)
        ],
        out_specs=pl.BlockSpec((tb, OUT_PAD), lambda i: (i, 0)),
        compiler_params=pltpu.CompilerParams(
            dimension_semantics=("parallel",),
        ),
    )(x, w1_in, b1_in, w2_in, b2_in)

    return out_padded[:, :out_dim]


def init_params(key, embed_dim=512, hidden=256, out_dim=2, dtype=jnp.float32):
    """Deterministic init mimicking PyTorch nn.Linear default (U[-1/sqrt(fan_in), +1/sqrt(fan_in)])."""
    k1, k2, k3, k4 = jax.random.split(key, 4)
    bound1 = 1.0 / (embed_dim ** 0.5)
    bound2 = 1.0 / (hidden ** 0.5)
    # stored as [in, out] (transposed vs. PyTorch's [out, in])
    w1 = jax.random.uniform(k1, (embed_dim, hidden), dtype, -bound1, bound1)
    b1 = jax.random.uniform(k2, (1, hidden), dtype, -bound1, bound1)
    w2 = jax.random.uniform(k3, (hidden, out_dim), dtype, -bound2, bound2)
    b2 = jax.random.uniform(k4, (1, out_dim), dtype, -bound2, bound2)
    return w1, b1, w2, b2


def clip_head_ref(x, w1, b1, w2, b2):
    h = jnp.maximum(x @ w1 + b1, 0.0)
    return h @ w2 + b2


if __name__ == "__main__":
    key = jax.random.PRNGKey(0)
    kx, kp = jax.random.split(key)

    B, D = 8, 512  # small batch, default embed_dim of the module
    x = jax.random.normal(kx, (B, D), jnp.float32)
    w1, b1, w2, b2 = init_params(kp, embed_dim=D)

    out = clip_head(x, w1, b1, w2, b2)
    out = jax.block_until_ready(out)

    ref = clip_head_ref(x, w1, b1, w2, b2)
    assert out.shape == (B, 2), out.shape
    # bf16 matmul operands (f32 accumulate) -> loosened tolerance vs f32 reference.
    assert jnp.allclose(out, ref, atol=2e-2, rtol=2e-2), "mismatch vs reference"

    print("KERNEL_OK")
</pallas_src>

<mosaic_0001>
module attributes {stable_mosaic.version = 11 : i64} {
  func.func @clip_head_kernel(%arg0: i32, %arg1: memref<8x512xf32, #tpu.memory_space<vmem>>, %arg2: memref<512x256xbf16, #tpu.memory_space<vmem>>, %arg3: memref<1x256xf32, #tpu.memory_space<vmem>>, %arg4: memref<256x8xbf16, #tpu.memory_space<vmem>>, %arg5: memref<1x8xf32, #tpu.memory_space<vmem>>, %arg6: memref<8x8xf32, #tpu.memory_space<vmem>>) attributes {dimension_semantics = [#tpu.dimension_semantics<parallel>], iteration_bounds = array<i64: 1>, scalar_prefetch = 0 : i64, scratch_operands = 0 : i64, tpu.core_type = #tpu.core_type<tc>, window_params = [{transform_indices = @transform_0, window_bounds = array<i64: 8, 512>}, {pipeline_mode = #tpu.pipeline_mode<synchronous>, transform_indices = @transform_1, window_bounds = array<i64: 512, 256>}, {pipeline_mode = #tpu.pipeline_mode<synchronous>, transform_indices = @transform_2, window_bounds = array<i64: 1, 256>}, {pipeline_mode = #tpu.pipeline_mode<synchronous>, transform_indices = @transform_3, window_bounds = array<i64: 256, 8>}, {pipeline_mode = #tpu.pipeline_mode<synchronous>, transform_indices = @transform_4, window_bounds = array<i64: 1, 8>}, {transform_indices = @transform_5, window_bounds = array<i64: 8, 8>}]} {
    %c0 = arith.constant 0 : index
    %c0_0 = arith.constant 0 : index
    %0 = vector.load %arg1[%c0, %c0_0] : memref<8x512xf32, #tpu.memory_space<vmem>>, vector<8x512xf32>
    %1 = arith.truncf %0 : vector<8x512xf32> to vector<8x512xbf16>
    %c0_1 = arith.constant 0 : index
    %c0_2 = arith.constant 0 : index
    %2 = vector.load %arg2[%c0_1, %c0_2] : memref<512x256xbf16, #tpu.memory_space<vmem>>, vector<512x256xbf16>
    %cst = arith.constant dense<0.000000e+00> : vector<8x256xf32>
    %3 = tpu.matmul %1, %2, %cst {dimension_numbers = #tpu.dot_dimension_numbers<[1], [0], [0], [1], [0, 0, 1, 1], [], []>} : vector<8x512xbf16>, vector<512x256xbf16>, vector<8x256xf32> -> vector<8x256xf32>
    %c0_3 = arith.constant 0 : index
    %c0_4 = arith.constant 0 : index
    %4 = vector.load %arg3[%c0_3, %c0_4] : memref<1x256xf32, #tpu.memory_space<vmem>>, vector<1x256xf32>
    %5 = vector.broadcast %4 : vector<1x256xf32> to vector<8x256xf32>
    %6 = arith.addf %3, %5 : vector<8x256xf32>
    %cst_5 = arith.constant 0.000000e+00 : f32
    %7 = vector.broadcast %cst_5 : f32 to vector<8x256xf32>
    %8 = arith.maximumf %6, %7 : vector<8x256xf32>
    %9 = arith.truncf %8 : vector<8x256xf32> to vector<8x256xbf16>
    %c0_6 = arith.constant 0 : index
    %c0_7 = arith.constant 0 : index
    %10 = vector.load %arg4[%c0_6, %c0_7] : memref<256x8xbf16, #tpu.memory_space<vmem>>, vector<256x8xbf16>
    %cst_8 = arith.constant dense<0.000000e+00> : vector<8x8xf32>
    %11 = tpu.matmul %9, %10, %cst_8 {dimension_numbers = #tpu.dot_dimension_numbers<[1], [0], [0], [1], [0, 0, 1, 1], [], []>} : vector<8x256xbf16>, vector<256x8xbf16>, vector<8x8xf32> -> vector<8x8xf32>
    %c0_9 = arith.constant 0 : index
    %c0_10 = arith.constant 0 : index
    %12 = vector.load %arg5[%c0_9, %c0_10] : memref<1x8xf32, #tpu.memory_space<vmem>>, vector<1x8xf32>
    %13 = vector.broadcast %12 : vector<1x8xf32> to vector<8x8xf32>
    %14 = arith.addf %11, %13 : vector<8x8xf32>
    %c0_11 = arith.constant 0 : index
    %c0_12 = arith.constant 0 : index
    %15 = vector.load %arg6[%c0_11, %c0_12] : memref<8x8xf32, #tpu.memory_space<vmem>>, vector<8x8xf32>
    tpu.vector_store %arg6[%c0_11, %c0_12], %14 {strides = array<i32>} : memref<8x8xf32, #tpu.memory_space<vmem>>, vector<8x8xf32>,
    return
  }
  func.func @transform_0(%arg0: i32) -> (i32, i32) {
    %c0_i32 = arith.constant 0 : i32
    %c0_i32_0 = arith.constant 0 : i32
    return %arg0, %c0_i32 : i32, i32
  }
  func.func @transform_1(%arg0: i32) -> (i32, i32) {
    %c0_i32 = arith.constant 0 : i32
    %c0_i32_0 = arith.constant 0 : i32
    %c0_i32_1 = arith.constant 0 : i32
    return %c0_i32, %c0_i32_0 : i32, i32
  }
  func.func @transform_2(%arg0: i32) -> (i32, i32) {
    %c0_i32 = arith.constant 0 : i32
    %c0_i32_0 = arith.constant 0 : i32
    %c0_i32_1 = arith.constant 0 : i32
    return %c0_i32, %c0_i32_0 : i32, i32
  }
  func.func @transform_3(%arg0: i32) -> (i32, i32) {
    %c0_i32 = arith.constant 0 : i32
    %c0_i32_0 = arith.constant 0 : i32
    %c0_i32_1 = arith.constant 0 : i32
    return %c0_i32, %c0_i32_0 : i32, i32
  }
  func.func @transform_4(%arg0: i32) -> (i32, i32) {
    %c0_i32 = arith.constant 0 : i32
    %c0_i32_0 = arith.constant 0 : i32
    %c0_i32_1 = arith.constant 0 : i32
    return %c0_i32, %c0_i32_0 : i32, i32
  }
  func.func @transform_5(%arg0: i32) -> (i32, i32) {
    %c0_i32 = arith.constant 0 : i32
    %c0_i32_0 = arith.constant 0 : i32
    return %arg0, %c0_i32 : i32, i32
  }
}

</mosaic_0001>

<llo_original>
// kernel: tpu_custom_call.1
$region0: #{tpu_custom_call.1}
  #allocation0 [shape = 'u32[]', space=smem, size = 0x4, offset = 0x4, fixed_abs, tag = 'smem constant byte address 0x4 - core index']
  #allocation1 [shape = 'u32[144,128]{1,0:T(1,128)}', space=vmem, size = 0x12000, scoped, tag = 'internal scratch']
  %s0 = inlined_call_operand.vmem [shape: f32[8,512], index: 0, kind: input, shape index: {}]
  %s1 = inlined_call_operand.hbm [shape: bf16[512,256], index: 1, kind: input, shape index: {}]
  %s2 = inlined_call_operand.vmem [shape: f32[1,256], index: 2, kind: input, shape index: {}]
  %s3 = inlined_call_operand.vmem [shape: bf16[256,8], index: 3, kind: input, shape index: {}]
  %s4 = inlined_call_operand.vmem [shape: f32[1,8], index: 4, kind: input, shape index: {}]
  %s5 = inlined_call_operand.hbm [shape: f32[8,8], index: 5, kind: output, shape index: {}]
  %s6 = sld [smem:[#allocation0]]
  $region34: #{tpu_custom_call.1} parent=0
    _
  %s8 = ssub.s32 1, %s6
  %s9 = scalar_select 0, %s8, %s6
  $region1: #{tpu_custom_call.1} parent=0
    #allocation2 [shape = 'u8[262144]{0}', space=vmem, size = 0x40000, scoped, tag = 'input window, operand 1, single buffered']
    #allocation3 [shape = 's32[1]{0}', space=sflag, size = 0x4, scoped, tag = 'scoped memory for tpu_custom_call.1']
    #allocation4 [shape = 's32[1]{0}', space=sflag, size = 0x4, scoped, tag = 'scoped memory for tpu_custom_call.1']
    #allocation5 [shape = 'u8[4096]{0}', space=vmem, size = 0x1000, scoped, tag = 'output window, operand 0, single buffered']
    %10 = vsyncpa [#allocation3], 0
    %11 = vsyncpa [#allocation4], 0
    // Predicated region
    $region2: #{tpu_custom_call.1} parent=1 // pred_check
      _
    $region3: #{tpu_custom_call.1} parent=1 // pred_check_branch
      %13 = sbr.rel (0) target = $region5
    $region4: #{tpu_custom_call.1} parent=1 // pred_region
      _
    $region5: #{tpu_custom_call.1} parent=1 // pred_fallthru
      _
    // Predicated region
    $region6: #{tpu_custom_call.1} parent=1 // pred_check
      _
    $region7: #{tpu_custom_call.1} parent=1 // pred_check_branch
      %15 = sbr.rel (0) target = $region9
    $region8: #{tpu_custom_call.1} parent=1 // pred_region
      %s17 = ssub.s32 8192, 8192
      %18 = vsyncadd [#allocation3], %s17
      %s19 = sshll.u32 [#allocation2], 4
      %s20 = int_to_ptr.vmem [resolvable:$true] %s19
      %25 = dma.hbm_to_vmem [thread:$0]  %s1, 8192, %s20, [#allocation3], 128, 128, 8
    $region9: #{tpu_custom_call.1} parent=1 // pred_fallthru
      _
    // Predicated region
    $region10: #{tpu_custom_call.1} parent=1 // pred_check
      _
    $region11: #{tpu_custom_call.1} parent=1 // pred_check_branch
      %27 = sbr.rel (0) target = $region13
    $region12: #{tpu_custom_call.1} parent=1 // pred_region
      _
    $region13: #{tpu_custom_call.1} parent=1 // pred_fallthru
      _
    // Predicated region
    $region14: #{tpu_custom_call.1} parent=1 // pred_check
      _
    $region15: #{tpu_custom_call.1} parent=1 // pred_check_branch
      %29 = sbr.rel (0) target = $region17
    $region16: #{tpu_custom_call.1} parent=1 // pred_region
      _
    $region17: #{tpu_custom_call.1} parent=1 // pred_fallthru
      _
    // Predicated region
    $region18: #{tpu_custom_call.1} parent=1 // pred_check
      _
    $region19: #{tpu_custom_call.1} parent=1 // pred_check_branch
      %31 = sbr.rel (0) target = $region21
    $region20: #{tpu_custom_call.1} parent=1 // pred_region
      _
    $region21: #{tpu_custom_call.1} parent=1 // pred_fallthru
      _
    // Predicated region
    $region22: #{tpu_custom_call.1} parent=1 // pred_check
      _
    $region23: #{tpu_custom_call.1} parent=1 // pred_check_branch
      %33 = sbr.rel (0) target = $region25
    $region24: #{tpu_custom_call.1} parent=1 // pred_region
      %34 = dma.done [#allocation3], 8192
    $region25: #{tpu_custom_call.1} parent=1 // pred_fallthru
      _
    %v36 = vld [vmem:[%s0] sm:$0xff]
    %v37 = vld [vmem:[%s0 + $0x8] sm:$0xff]
    %v38 = vld [vmem:[%s0 + $0x10] sm:$0xff]
    %v39 = vld [vmem:[%s0 + $0x18] sm:$0xff]
    %v40 = vpack.c.bf16 %v36, %v36
    %v41 = vpack.c.bf16 %v37, %v37
    %v42 = vpack.c.bf16 %v38, %v38
    %v43 = vpack.c.bf16 %v39, %v39
    %v44 = vld [vmem:[#allocation2] sm:$0xff]
    %v45 = vld [vmem:[#allocation2 + $0x8] sm:$0xff]
    %v46 = vld [vmem:[#allocation2 + $0x10] sm:$0xff]
    %v47 = vld [vmem:[#allocation2 + $0x18] sm:$0xff]
    %v48 = vld [vmem:[#allocation2 + $0x20] sm:$0xff]
    %v49 = vld [vmem:[#allocation2 + $0x28] sm:$0xff]
    %v50 = vld [vmem:[#allocation2 + $0x30] sm:$0xff]
    %v51 = vld [vmem:[#allocation2 + $0x38] sm:$0xff]
    %v52 = vld [vmem:[#allocation2 + $0x40] sm:$0xff]
    %v53 = vld [vmem:[#allocation2 + $0x48] sm:$0xff]
    %v54 = vld [vmem:[#allocation2 + $0x50] sm:$0xff]
    %v55 = vld [vmem:[#allocation2 + $0x58] sm:$0xff]
    %v56 = vld [vmem:[#allocation2 + $0x60] sm:$0xff]
    %v57 = vld [vmem:[#allocation2 + $0x68] sm:$0xff]
    %v58 = vld [vmem:[#allocation2 + $0x70] sm:$0xff]
    %v59 = vld [vmem:[#allocation2 + $0x78] sm:$0xff]
    %v60 = vld [vmem:[#allocation2 + $0x80] sm:$0xff]
    %v61 = vld [vmem:[#allocation2 + $0x88] sm:$0xff]
    %v62 = vld [vmem:[#allocation2 + $0x90] sm:$0xff]
    %v63 = vld [vmem:[#allocation2 + $0x98] sm:$0xff]
    %v64 = vld [vmem:[#allocation2 + $0xa0] sm:$0xff]
    %v65 = vld [vmem:[#allocation2 + $0xa8] sm:$0xff]
    %v66 = vld [vmem:[#allocation2 + $0xb0] sm:$0xff]
    %v67 = vld [vmem:[#allocation2 + $0xb8] sm:$0xff]
    %v68 = vld [vmem:[#allocation2 + $0xc0] sm:$0xff]
    %v69 = vld [vmem:[#allocation2 + $0xc8] sm:$0xff]
    %v70 = vld [vmem:[#allocation2 + $0xd0] sm:$0xff]
    %v71 = vld [vmem:[#allocation2 + $0xd8] sm:$0xff]
    %v72 = vld [vmem:[#allocation2 + $0xe0] sm:$0xff]
    %v73 = vld [vmem:[#allocation2 + $0xe8] sm:$0xff]
    %v74 = vld [vmem:[#allocation2 + $0xf0] sm:$0xff]
    %v75 = vld [vmem:[#allocation2 + $0xf8] sm:$0xff]
    %v76 = vld [vmem:[#allocation2 + $0x100] sm:$0xff]
    %v77 = vld [vmem:[#allocation2 + $0x108] sm:$0xff]
    %v78 = vld [vmem:[#allocation2 + $0x110] sm:$0xff]
    %v79 = vld [vmem:[#allocation2 + $0x118] sm:$0xff]
    %v80 = vld [vmem:[#allocation2 + $0x120] sm:$0xff]
    %v81 = vld [vmem:[#allocation2 + $0x128] sm:$0xff]
    %v82 = vld [vmem:[#allocation2 + $0x130] sm:$0xff]
    %v83 = vld [vmem:[#allocation2 + $0x138] sm:$0xff]
    %v84 = vld [vmem:[#allocation2 + $0x140] sm:$0xff]
    %v85 = vld [vmem:[#allocation2 + $0x148] sm:$0xff]
    %v86 = vld [vmem:[#allocation2 + $0x150] sm:$0xff]
    %v87 = vld [vmem:[#allocation2 + $0x158] sm:$0xff]
    %v88 = vld [vmem:[#allocation2 + $0x160] sm:$0xff]
    %v89 = vld [vmem:[#allocation2 + $0x168] sm:$0xff]
    %v90 = vld [vmem:[#allocation2 + $0x170] sm:$0xff]
    %v91 = vld [vmem:[#allocation2 + $0x178] sm:$0xff]
    %v92 = vld [vmem:[#allocation2 + $0x180] sm:$0xff]
    %v93 = vld [vmem:[#allocation2 + $0x188] sm:$0xff]
    %v94 = vld [vmem:[#allocation2 + $0x190] sm:$0xff]
    %v95 = vld [vmem:[#allocation2 + $0x198] sm:$0xff]
    %v96 = vld [vmem:[#allocation2 + $0x1a0] sm:$0xff]
    %v97 = vld [vmem:[#allocation2 + $0x1a8] sm:$0xff]
    %v98 = vld [vmem:[#allocation2 + $0x1b0] sm:$0xff]
    %v99 = vld [vmem:[#allocation2 + $0x1b8] sm:$0xff]
    %v100 = vld [vmem:[#allocation2 + $0x1c0] sm:$0xff]
    %v101 = vld [vmem:[#allocation2 + $0x1c8] sm:$0xff]
    %v102 = vld [vmem:[#allocation2 + $0x1d0] sm:$0xff]
    %v103 = vld [vmem:[#allocation2 + $0x1d8] sm:$0xff]
    %v104 = vld [vmem:[#allocation2 + $0x1e0] sm:$0xff]
    %v105 = vld [vmem:[#allocation2 + $0x1e8] sm:$0xff]
    %v106 = vld [vmem:[#allocation2 + $0x1f0] sm:$0xff]
    %v107 = vld [vmem:[#allocation2 + $0x1f8] sm:$0xff]
    %v108 = vld [vmem:[%s2] sm:$0x3]
    %v110 = vlaneseq
    %v111 = vshrl.u32 %v110, 7
    %v112 = vsub.s32 0, %v111
    %v113 = vrot.slane %v108, %v112
    %v114 = vlaneseq
    %v115 = vshrl.u32 %v114, 7
    %v116 = vsub.s32 1, %v115
    %v117 = vrot.slane %v108, %v116
    %v184 = vunpack.c.l.b16 %v44
    %v185 = vunpack.c.h.b16 %v44
    %v186 = vunpack.c.l.b16 %v45
    %v187 = vunpack.c.h.b16 %v45
    %v188 = vunpack.c.l.b16 %v46
    %v189 = vunpack.c.h.b16 %v46
    %v190 = vunpack.c.l.b16 %v47
    %v191 = vunpack.c.h.b16 %v47
    %v192 = vunpack.c.l.b16 %v48
    %v193 = vunpack.c.h.b16 %v48
    %v194 = vunpack.c.l.b16 %v49
    %v195 = vunpack.c.h.b16 %v49
    %v196 = vunpack.c.l.b16 %v50
    %v197 = vunpack.c.h.b16 %v50
    %v198 = vunpack.c.l.b16 %v51
    %v199 = vunpack.c.h.b16 %v51
    %v200 = vunpack.c.l.b16 %v52
    %v201 = vunpack.c.h.b16 %v52
    %v202 = vunpack.c.l.b16 %v53
    %v203 = vunpack.c.h.b16 %v53
    %v204 = vunpack.c.l.b16 %v54
    %v205 = vunpack.c.h.b16 %v54
    %v206 = vunpack.c.l.b16 %v55
    %v207 = vunpack.c.h.b16 %v55
    %v208 = vunpack.c.l.b16 %v56
    %v209 = vunpack.c.h.b16 %v56
    %v210 = vunpack.c.l.b16 %v57
    %v211 = vunpack.c.h.b16 %v57
    %v212 = vunpack.c.l.b16 %v58
    %v213 = vunpack.c.h.b16 %v58
    %v214 = vunpack.c.l.b16 %v59
    %v215 = vunpack.c.h.b16 %v59
    %v216 = vunpack.c.l.b16 %v60
    %v217 = vunpack.c.h.b16 %v60
    %v218 = vunpack.c.l.b16 %v61
    %v219 = vunpack.c.h.b16 %v61
    %v220 = vunpack.c.l.b16 %v62
    %v221 = vunpack.c.h.b16 %v62
    %v222 = vunpack.c.l.b16 %v63
    %v223 = vunpack.c.h.b16 %v63
    %v224 = vunpack.c.l.b16 %v64
    %v225 = vunpack.c.h.b16 %v64
    %v226 = vunpack.c.l.b16 %v65
    %v227 = vunpack.c.h.b16 %v65
    %v228 = vunpack.c.l.b16 %v66
    %v229 = vunpack.c.h.b16 %v66
    %v230 = vunpack.c.l.b16 %v67
    %v231 = vunpack.c.h.b16 %v67
    %v232 = vunpack.c.l.b16 %v68
    %v233 = vunpack.c.h.b16 %v68
    %v234 = vunpack.c.l.b16 %v69
    %v235 = vunpack.c.h.b16 %v69
    %v236 = vunpack.c.l.b16 %v70
    %v237 = vunpack.c.h.b16 %v70
    %v238 = vunpack.c.l.b16 %v71
    %v239 = vunpack.c.h.b16 %v71
    %v240 = vunpack.c.l.b16 %v72
    %v241 = vunpack.c.h.b16 %v72
    %v242 = vunpack.c.l.b16 %v73
    %v243 = vunpack.c.h.b16 %v73
    %v244 = vunpack.c.l.b16 %v74
    %v245 = vunpack.c.h.b16 %v74
    %v246 = vunpack.c.l.b16 %v75
    %v247 = vunpack.c.h.b16 %v75
    %v248 = vunpack.c.l.b16 %v76
    %v249 = vunpack.c.h.b16 %v76
    %v250 = vunpack.c.l.b16 %v77
    %v251 = vunpack.c.h.b16 %v77
    %v252 = vunpack.c.l.b16 %v78
    %v253 = vunpack.c.h.b16 %v78
    %v254 = vunpack.c.l.b16 %v79
    %v255 = vunpack.c.h.b16 %v79
    %v256 = vunpack.c.l.b16 %v80
    %v257 = vunpack.c.h.b16 %v80
    %v258 = vunpack.c.l.b16 %v81
    %v259 = vunpack.c.h.b16 %v81
    %v260 = vunpack.c.l.b16 %v82
    %v261 = vunpack.c.h.b16 %v82
    %v262 = vunpack.c.l.b16 %v83
    %v263 = vunpack.c.h.b16 %v83
    %v264 = vunpack.c.l.b16 %v84
    %v265 = vunpack.c.h.b16 %v84
    %v266 = vunpack.c.l.b16 %v85
    %v267 = vunpack.c.h.b16 %v85
    %v268 = vunpack.c.l.b16 %v86
    %v269 = vunpack.c.h.b16 %v86
    %v270 = vunpack.c.l.b16 %v87
    %v271 = vunpack.c.h.b16 %v87
    %v272 = vunpack.c.l.b16 %v88
    %v273 = vunpack.c.h.b16 %v88
    %v274 = vunpack.c.l.b16 %v89
    %v275 = vunpack.c.h.b16 %v89
    %v276 = vunpack.c.l.b16 %v90
    %v277 = vunpack.c.h.b16 %v90
    %v278 = vunpack.c.l.b16 %v91
    %v279 = vunpack.c.h.b16 %v91
    %v280 = vunpack.c.l.b16 %v92
    %v281 = vunpack.c.h.b16 %v92
    %v282 = vunpack.c.l.b16 %v93
    %v283 = vunpack.c.h.b16 %v93
    %v284 = vunpack.c.l.b16 %v94
    %v285 = vunpack.c.h.b16 %v94
    %v286 = vunpack.c.l.b16 %v95
    %v287 = vunpack.c.h.b16 %v95
    %v288 = vunpack.c.l.b16 %v96
    %v289 = vunpack.c.h.b16 %v96
    %v290 = vunpack.c.l.b16 %v97
    %v291 = vunpack.c.h.b16 %v97
    %v292 = vunpack.c.l.b16 %v98
    %v293 = vunpack.c.h.b16 %v98
    %v294 = vunpack.c.l.b16 %v99
    %v295 = vunpack.c.h.b16 %v99
    %v296 = vunpack.c.l.b16 %v100
    %v297 = vunpack.c.h.b16 %v100
    %v298 = vunpack.c.l.b16 %v101
    %v299 = vunpack.c.h.b16 %v101
    %v300 = vunpack.c.l.b16 %v102
    %v301 = vunpack.c.h.b16 %v102
    %v302 = vunpack.c.l.b16 %v103
    %v303 = vunpack.c.h.b16 %v103
    %v304 = vunpack.c.l.b16 %v104
    %v305 = vunpack.c.h.b16 %v104
    %v306 = vunpack.c.l.b16 %v105
    %v307 = vunpack.c.h.b16 %v105
    %v308 = vunpack.c.l.b16 %v106
    %v309 = vunpack.c.h.b16 %v106
    %v310 = vunpack.c.l.b16 %v107
    %v311 = vunpack.c.h.b16 %v107
    %v312 = vpack.c.b16 %v186, %v184
    %v313 = vpack.c.b16 %v187, %v185
    %v314 = vpack.c.b16 %v190, %v188
    %v315 = vpack.c.b16 %v191, %v189
    %v316 = vpack.c.b16 %v194, %v192
    %v317 = vpack.c.b16 %v195, %v193
    %v318 = vpack.c.b16 %v198, %v196
    %v319 = vpack.c.b16 %v199, %v197
    %v320 = vpack.c.b16 %v202, %v200
    %v321 = vpack.c.b16 %v203, %v201
    %v322 = vpack.c.b16 %v206, %v204
    %v323 = vpack.c.b16 %v207, %v205
    %v324 = vpack.c.b16 %v210, %v208
    %v325 = vpack.c.b16 %v211, %v209
    %v326 = vpack.c.b16 %v214, %v212
    %v327 = vpack.c.b16 %v215, %v213
    %v328 = vpack.c.b16 %v218, %v216
    %v329 = vpack.c.b16 %v219, %v217
    %v330 = vpack.c.b16 %v222, %v220
    %v331 = vpack.c.b16 %v223, %v221
    %v332 = vpack.c.b16 %v226, %v224
    %v333 = vpack.c.b16 %v227, %v225
    %v334 = vpack.c.b16 %v230, %v228
    %v335 = vpack.c.b16 %v231, %v229
    %v336 = vpack.c.b16 %v234, %v232
    %v337 = vpack.c.b16 %v235, %v233
    %v338 = vpack.c.b16 %v238, %v236
    %v339 = vpack.c.b16 %v239, %v237
    %v340 = vpack.c.b16 %v242, %v240
    %v341 = vpack.c.b16 %v243, %v241
    %v342 = vpack.c.b16 %v246, %v244
    %v343 = vpack.c.b16 %v247, %v245
    %v344 = vpack.c.b16 %v250, %v248
    %v345 = vpack.c.b16 %v251, %v249
    %v346 = vpack.c.b16 %v254, %v252
    %v347 = vpack.c.b16 %v255, %v253
    %v348 = vpack.c.b16 %v258, %v256
    %v349 = vpack.c.b16 %v259, %v257
    %v350 = vpack.c.b16 %v262, %v260
    %v351 = vpack.c.b16 %v263, %v261
    %v352 = vpack.c.b16 %v266, %v264
    %v353 = vpack.c.b16 %v267, %v265
    %v354 = vpack.c.b16 %v270, %v268
    %v355 = vpack.c.b16 %v271, %v269
    %v356 = vpack.c.b16 %v274, %v272
    %v357 = vpack.c.b16 %v275, %v273
    %v358 = vpack.c.b16 %v278, %v276
    %v359 = vpack.c.b16 %v279, %v277
    %v360 = vpack.c.b16 %v282, %v280
    %v361 = vpack.c.b16 %v283, %v281
    %v362 = vpack.c.b16 %v286, %v284
    %v363 = vpack.c.b16 %v287, %v285
    %v364 = vpack.c.b16 %v290, %v288
    %v365 = vpack.c.b16 %v291, %v289
    %v366 = vpack.c.b16 %v294, %v292
    %v367 = vpack.c.b16 %v295, %v293
    %v368 = vpack.c.b16 %v298, %v296
    %v369 = vpack.c.b16 %v299, %v297
    %v370 = vpack.c.b16 %v302, %v300
    %v371 = vpack.c.b16 %v303, %v301
    %v372 = vpack.c.b16 %v306, %v304
    %v373 = vpack.c.b16 %v307, %v305
    %v374 = vpack.c.b16 %v310, %v308
    %v375 = vpack.c.b16 %v311, %v309
    %440 = vmatprep.subr.bf16.mxu0 %v313
    %441 = vmatpush1.bf16.msra.mxu0 %v312
    %442 = vmatprep.subr.bf16.mxu0 %v315
    %443 = vmatpush1.bf16.msra.mxu0 %v314
    %444 = vmatprep.subr.bf16.mxu0 %v317
    %445 = vmatpush1.bf16.msra.mxu0 %v316
    %446 = vmatprep.subr.bf16.mxu0 %v319
    %447 = vmatpush1.bf16.msra.mxu0 %v318
    %448 = vmatprep.subr.bf16.mxu0 %v321
    %449 = vmatpush1.bf16.msra.mxu0 %v320
    %450 = vmatprep.subr.bf16.mxu0 %v323
    %451 = vmatpush1.bf16.msra.mxu0 %v322
    %452 = vmatprep.subr.bf16.mxu0 %v325
    %453 = vmatpush1.bf16.msra.mxu0 %v324
    %454 = vmatprep.subr.bf16.mxu0 %v327
    %455 = vmatpush1.bf16.msra.mxu0 %v326
    %456 = vmatprep.subr.bf16.mxu0 %v329
    %457 = vmatpush1.bf16.msra.mxu0 %v328
    %458 = vmatprep.subr.bf16.mxu0 %v331
    %459 = vmatpush1.bf16.msra.mxu0 %v330
    %460 = vmatprep.subr.bf16.mxu0 %v333
    %461 = vmatpush1.bf16.msra.mxu0 %v332
    %462 = vmatprep.subr.bf16.mxu0 %v335
    %463 = vmatpush1.bf16.msra.mxu0 %v334
    %464 = vmatprep.subr.bf16.mxu0 %v337
    %465 = vmatpush1.bf16.msra.mxu0 %v336
    %466 = vmatprep.subr.bf16.mxu0 %v339
    %467 = vmatpush1.bf16.msra.mxu0 %v338
    %468 = vmatprep.subr.bf16.mxu0 %v341
    %469 = vmatpush1.bf16.msra.mxu0 %v340
    %470 = vmatprep.subr.bf16.mxu0 %v343
    %471 = vmatpush1.bf16.msra.mxu0 %v342
    %472 = vmatprep.mubr.bf16.mxu0 %v41
    %473 = vmatmul.mubr.bf16.gmra.mrb[0].mxu0 %v40
    %v474 = vpop.f32.mrb[0].mxu0
    %v475 = vadd.f32 %v113, %v474
    %v476 = vpop.f32.mrb[0].mxu0
    %v477 = vadd.f32 %v117, %v476
    %v478 = vpop.f32.mrb[0].mxu0
    %v479 = vpop.f32.mrb[0].mxu0
    %480 = vdwg.mxu0
    %481 = vmatprep.subr.bf16.mxu0 %v345
    %482 = vmatpush1.bf16.msra.mxu0 %v344
    %483 = vmatprep.subr.bf16.mxu0 %v347
    %484 = vmatpush1.bf16.msra.mxu0 %v346
    %485 = vmatprep.subr.bf16.mxu0 %v349
    %486 = vmatpush1.bf16.msra.mxu0 %v348
    %487 = vmatprep.subr.bf16.mxu0 %v351
    %488 = vmatpush1.bf16.msra.mxu0 %v350
    %489 = vmatprep.subr.bf16.mxu0 %v353
    %490 = vmatpush1.bf16.msra.mxu0 %v352
    %491 = vmatprep.subr.bf16.mxu0 %v355
    %492 = vmatpush1.bf16.msra.mxu0 %v354
    %493 = vmatprep.subr.bf16.mxu0 %v357
    %494 = vmatpush1.bf16.msra.mxu0 %v356
    %495 = vmatprep.subr.bf16.mxu0 %v359
    %496 = vmatpush1.bf16.msra.mxu0 %v358
    %497 = vmatprep.subr.bf16.mxu0 %v361
    %498 = vmatpush1.bf16.msra.mxu0 %v360
    %499 = vmatprep.subr.bf16.mxu0 %v363
    %500 = vmatpush1.bf16.msra.mxu0 %v362
    %501 = vmatprep.subr.bf16.mxu0 %v365
    %502 = vmatpush1.bf16.msra.mxu0 %v364
    %503 = vmatprep.subr.bf16.mxu0 %v367
    %504 = vmatpush1.bf16.msra.mxu0 %v366
    %505 = vmatprep.subr.bf16.mxu0 %v369
    %506 = vmatpush1.bf16.msra.mxu0 %v368
    %507 = vmatprep.subr.bf16.mxu0 %v371
    %508 = vmatpush1.bf16.msra.mxu0 %v370
    %509 = vmatprep.subr.bf16.mxu0 %v373
    %510 = vmatpush1.bf16.msra.mxu0 %v372
    %511 = vmatprep.subr.bf16.mxu0 %v375
    %512 = vmatpush1.bf16.msra.mxu0 %v374
    %513 = vmatprep.mubr.bf16.mxu0 %v43
    %514 = vmatmul.mubr.bf16.gmra.mrb[0].mxu0 %v42
    %v515 = vpop.f32.mrb[0].mxu0
    %v516 = vadd.f32 %v475, %v515
    %v517 = vpop.f32.mrb[0].mxu0
    %v518 = vadd.f32 %v477, %v517
    %v519 = vpop.f32.mrb[0].mxu0
    %v520 = vpop.f32.mrb[0].mxu0
    %521 = vdwg.mxu0
    %v522 = vmax.f32 %v516, 0.0
    %v523 = vmax.f32 %v518, 0.0
    %v524 = vpack.c.bf16 %v522, %v522
    %v525 = vpack.c.bf16 %v523, %v523
    %v526 = vld [vmem:[%s3] sm:$0xf]
    %v527 = vld [vmem:[%s3 + $0x4] sm:$0xf]
    %v528 = vld [vmem:[%s3 + $0x8] sm:$0xf]
    %v529 = vld [vmem:[%s3 + $0xc] sm:$0xf]
    %v530 = vld [vmem:[%s3 + $0x10] sm:$0xf]
    %v531 = vld [vmem:[%s3 + $0x14] sm:$0xf]
    %v532 = vld [vmem:[%s3 + $0x18] sm:$0xf]
    %v533 = vld [vmem:[%s3 + $0x1c] sm:$0xf]
    %v534 = vld [vmem:[%s3 + $0x20] sm:$0xf]
    %v535 = vld [vmem:[%s3 + $0x24] sm:$0xf]
    %v536 = vld [vmem:[%s3 + $0x28] sm:$0xf]
    %v537 = vld [vmem:[%s3 + $0x2c] sm:$0xf]
    %v538 = vld [vmem:[%s3 + $0x30] sm:$0xf]
    %v539 = vld [vmem:[%s3 + $0x34] sm:$0xf]
    %v540 = vld [vmem:[%s3 + $0x38] sm:$0xf]
    %v541 = vld [vmem:[%s3 + $0x3c] sm:$0xf]
    %v542 = vld [vmem:[%s3 + $0x40] sm:$0xf]
    %v543 = vld [vmem:[%s3 + $0x44] sm:$0xf]
    %v544 = vld [vmem:[%s3 + $0x48] sm:$0xf]
    %v545 = vld [vmem:[%s3 + $0x4c] sm:$0xf]
    %v546 = vld [vmem:[%s3 + $0x50] sm:$0xf]
    %v547 = vld [vmem:[%s3 + $0x54] sm:$0xf]
    %v548 = vld [vmem:[%s3 + $0x58] sm:$0xf]
    %v549 = vld [vmem:[%s3 + $0x5c] sm:$0xf]
    %v550 = vld [vmem:[%s3 + $0x60] sm:$0xf]
    %v551 = vld [vmem:[%s3 + $0x64] sm:$0xf]
    %v552 = vld [vmem:[%s3 + $0x68] sm:$0xf]
    %v553 = vld [vmem:[%s3 + $0x6c] sm:$0xf]
    %v554 = vld [vmem:[%s3 + $0x70] sm:$0xf]
    %v555 = vld [vmem:[%s3 + $0x74] sm:$0xf]
    %v556 = vld [vmem:[%s3 + $0x78] sm:$0xf]
    %v557 = vld [vmem:[%s3 + $0x7c] sm:$0xf]
    %v558 = vld [vmem:[%s4] sm:$0x1]
    %v560 = vlaneseq
    %v561 = vshrl.u32 %v560, 7
    %v562 = vsub.s32 0, %v561
    %v563 = vrot.slane %v558, %v562
    %v597 = vunpack.c.l.b16 %v526
    %v598 = vunpack.c.l.b16 %v527
    %v599 = vunpack.c.l.b16 %v528
    %v600 = vunpack.c.l.b16 %v529
    %v601 = vunpack.c.l.b16 %v530
    %v602 = vunpack.c.l.b16 %v531
    %v603 = vunpack.c.l.b16 %v532
    %v604 = vunpack.c.l.b16 %v533
    %v605 = vunpack.c.l.b16 %v534
    %v606 = vunpack.c.l.b16 %v535
    %v607 = vunpack.c.l.b16 %v536
    %v608 = vunpack.c.l.b16 %v537
    %v609 = vunpack.c.l.b16 %v538
    %v610 = vunpack.c.l.b16 %v539
    %v611 = vunpack.c.l.b16 %v540
    %v612 = vunpack.c.l.b16 %v541
    %v613 = vunpack.c.l.b16 %v542
    %v614 = vunpack.c.l.b16 %v543
    %v615 = vunpack.c.l.b16 %v544
    %v616 = vunpack.c.l.b16 %v545
    %v617 = vunpack.c.l.b16 %v546
    %v618 = vunpack.c.l.b16 %v547
    %v619 = vunpack.c.l.b16 %v548
    %v620 = vunpack.c.l.b16 %v549
    %v621 = vunpack.c.l.b16 %v550
    %v622 = vunpack.c.l.b16 %v551
    %v623 = vunpack.c.l.b16 %v552
    %v624 = vunpack.c.l.b16 %v553
    %v625 = vunpack.c.l.b16 %v554
    %v626 = vunpack.c.l.b16 %v555
    %v627 = vunpack.c.l.b16 %v556
    %v628 = vunpack.c.l.b16 %v557
    %v629 = vpack.c.b16 %v598, %v597
    %v630 = vpack.c.b16 %v600, %v599
    %v631 = vpack.c.b16 %v602, %v601
    %v632 = vpack.c.b16 %v604, %v603
    %v633 = vpack.c.b16 %v606, %v605
    %v634 = vpack.c.b16 %v608, %v607
    %v635 = vpack.c.b16 %v610, %v609
    %v636 = vpack.c.b16 %v612, %v611
    %v637 = vpack.c.b16 %v614, %v613
    %v638 = vpack.c.b16 %v616, %v615
    %v639 = vpack.c.b16 %v618, %v617
    %v640 = vpack.c.b16 %v620, %v619
    %v641 = vpack.c.b16 %v622, %v621
    %v642 = vpack.c.b16 %v624, %v623
    %v643 = vpack.c.b16 %v626, %v625
    %v644 = vpack.c.b16 %v628, %v627
    %661 = vmatprep.subr.bf16.mxu0 0
    %662 = vmatpush1.bf16.msra.mxu0 %v629
    %663 = vmatprep.subr.bf16.mxu0 0
    %664 = vmatpush1.bf16.msra.mxu0 %v630
    %665 = vmatprep.subr.bf16.mxu0 0
    %666 = vmatpush1.bf16.msra.mxu0 %v631
    %667 = vmatprep.subr.bf16.mxu0 0
    %668 = vmatpush1.bf16.msra.mxu0 %v632
    %669 = vmatprep.subr.bf16.mxu0 0
    %670 = vmatpush1.bf16.msra.mxu0 %v633
    %671 = vmatprep.subr.bf16.mxu0 0
    %672 = vmatpush1.bf16.msra.mxu0 %v634
    %673 = vmatprep.subr.bf16.mxu0 0
    %674 = vmatpush1.bf16.msra.mxu0 %v635
    %675 = vmatprep.subr.bf16.mxu0 0
    %676 = vmatpush1.bf16.msra.mxu0 %v636
    %677 = vmatprep.subr.bf16.mxu0 0
    %678 = vmatpush1.bf16.msra.mxu0 %v637
    %679 = vmatprep.subr.bf16.mxu0 0
    %680 = vmatpush1.bf16.msra.mxu0 %v638
    %681 = vmatprep.subr.bf16.mxu0 0
    %682 = vmatpush1.bf16.msra.mxu0 %v639
    %683 = vmatprep.subr.bf16.mxu0 0
    %684 = vmatpush1.bf16.msra.mxu0 %v640
    %685 = vmatprep.subr.bf16.mxu0 0
    %686 = vmatpush1.bf16.msra.mxu0 %v641
    %687 = vmatprep.subr.bf16.mxu0 0
    %688 = vmatpush1.bf16.msra.mxu0 %v642
    %689 = vmatprep.subr.bf16.mxu0 0
    %690 = vmatpush1.bf16.msra.mxu0 %v643
    %691 = vmatprep.subr.bf16.mxu0 0
    %692 = vmatpush1.bf16.msra.mxu0 %v644
    %693 = vmatprep.mubr.bf16.mxu0 %v525
    %694 = vmatmul.mubr.bf16.gmra.mrb[0].mxu0 %v524
    %v695 = vpop.f32.mrb[0].mxu0
    %v696 = vadd.f32 %v563, %v695
    %v697 = vpop.f32.mrb[0].mxu0
    %v698 = vpop.f32.mrb[0].mxu0
    %v699 = vpop.f32.mrb[0].mxu0
    %700 = vdwg.mxu0
    %vm701 = vcmask 64512
    %702 = vst.msk [vmem:[#allocation5] sm:$0xff] %vm701, %v696
    // Predicated region
    $region26: #{tpu_custom_call.1} parent=1 // pred_check
      _
    $region27: #{tpu_custom_call.1} parent=1 // pred_check_branch
      %704 = sbr.rel (0) target = $region29
    $region28: #{tpu_custom_call.1} parent=1 // pred_region
      %s706 = ssub.s32 128, 128
      %707 = vsyncadd [#allocation4], %s706
      %s709 = sshll.u32 [#allocation5], 4
      %s710 = int_to_ptr.vmem [resolvable:$true] %s709
      %712 = dma.vmem_to_hbm [thread:$0]  %s710, 128, %s5, [#allocation4]
    $region29: #{tpu_custom_call.1} parent=1 // pred_fallthru
      _
    // Predicated region
    $region30: #{tpu_custom_call.1} parent=1 // pred_check
      _
    $region31: #{tpu_custom_call.1} parent=1 // pred_check_branch
      %714 = sbr.rel (0) target = $region33
    $region32: #{tpu_custom_call.1} parent=1 // pred_region
      %715 = dma.done [#allocation4], 128
    $region33: #{tpu_custom_call.1} parent=1 // pred_fallthru
      _
    %716 = vsyncpa [#allocation3], 1
    %717 = vsyncpa [#allocation4], 1

</llo_original>
